<compile_context>
chip_gen: v7x
topology: tpu7x:2x2x1
jax: 0.10.0
libtpu: 0.0.40
codegen_flags: <defaults>
</compile_context>

<pallas_src>
import math

import jax
import jax.numpy as jnp
from jax.experimental import pallas as pl
from jax.experimental.pallas import tpu as pltpu


MAX_TILE_M = 512        # target row tile (multiple of 8 sublanes / 256-aligned MXU)
TILE_K = 256            # reduction tile when k must be tiled
MAX_TILE_N = 512        # target output-lane tile (multiple of 128 lanes)
K_RESIDENT_MAX = 2048   # collapse the k grid axis when the padded K <= this


def _round_up(x, m):
    return ((x + m - 1) // m) * m


def _pad_cast(arr, rows, cols, dtype):
    """Zero-pad a 2-D array to [rows, cols] and cast to dtype."""
    out = jnp.zeros((rows, cols), dtype)
    return out.at[: arr.shape[0], : arr.shape[1]].set(arr.astype(dtype))


def _pick_tile_m(m):
    """Row tile: as large as possible (arithmetic intensity / fewer B re-reads),
    but keep >=2 row blocks for megacore sharding and avoid >half-a-tile pad."""
    t = MAX_TILE_M
    while t > 128 and (_round_up(m, t) // t < 2 or _round_up(m, t) - m > t // 2):
        t //= 2
    return t


def _pick_tile_n(f_p):
    """Output-lane tile: <= MAX_TILE_N, multiple of 128, divides the padded F."""
    if f_p <= MAX_TILE_N:
        return f_p
    for t in (512, 256, 128):
        if f_p % t == 0:
            return t
    return 128


def _vmem_limit_bytes():
    """~75% of physical VMEM: ~96 MiB on v5e/v6e (128 MiB), ~48 MiB on v7x (64 MiB)."""
    cap = 64 * 1024 * 1024  # conservative fallback (safe on v7x)
    try:
        cap = pltpu.get_tpu_info().vmem_capacity_bytes
    except Exception:
        pass
    return (cap * 3) // 4


# ---------------------------------------------------------------------------
# Tiled-K kernels: grid (i, j, k); f32 VMEM accumulator, finalize on last k.
# ---------------------------------------------------------------------------
def _mm_acc_kernel(a_ref, b_ref, o_ref, acc_ref):
    k = pl.program_id(2)
    prod = jnp.dot(a_ref[...], b_ref[...], preferred_element_type=jnp.float32)

    @pl.when(k == 0)
    def _():
        acc_ref[...] = prod          # direct store: skip the zero-fill pass

    @pl.when(k > 0)
    def _():
        acc_ref[...] += prod

    @pl.when(k == pl.num_programs(2) - 1)
    def _():
        o_ref[...] = acc_ref[...].astype(o_ref.dtype)


def _mm_acc_bias_relu_kernel(a_ref, b_ref, bias_ref, o_ref, acc_ref):
    k = pl.program_id(2)
    prod = jnp.dot(a_ref[...], b_ref[...], preferred_element_type=jnp.float32)

    @pl.when(k == 0)
    def _():
        acc_ref[...] = prod

    @pl.when(k > 0)
    def _():
        acc_ref[...] += prod

    @pl.when(k == pl.num_programs(2) - 1)
    def _():
        out = acc_ref[...] + bias_ref[...]            # f32 epilogue (VPU)
        o_ref[...] = jnp.maximum(out, 0.0).astype(o_ref.dtype)


# ---------------------------------------------------------------------------
# Resident-K kernels: grid (j, i); whole reduction dim in one dot.  B's
# index_map is independent of i, so its block stays VMEM-resident across the
# inner row loop (no re-DMA) and no accumulator scratch is needed.
# ---------------------------------------------------------------------------
def _mm_res_kernel(a_ref, b_ref, o_ref):
    o_ref[...] = jnp.dot(a_ref[...], b_ref[...],
                         preferred_element_type=jnp.float32).astype(o_ref.dtype)


def _mm_res_bias_relu_kernel(a_ref, b_ref, bias_ref, o_ref):
    acc = jnp.dot(a_ref[...], b_ref[...], preferred_element_type=jnp.float32)
    o_ref[...] = jnp.maximum(acc + bias_ref[...], 0.0).astype(o_ref.dtype)


# ---------------------------------------------------------------------------
# Tiled matmul wrapper (optionally fused bias + ReLU finalize).
# ---------------------------------------------------------------------------
def _tiled_matmul(a, b, bias=None, *, out_dtype, tile_m, tile_n):
    """C = a @ b (+ bias, ReLU).

    a:    [M, K] bf16, M % tile_m == 0, K % 128 == 0 (and % TILE_K if K tiled)
    b:    [K, F] bf16, F % tile_n == 0
    bias: [1, F] f32 or None (bias implies the fused ReLU epilogue)
    """
    M, K = a.shape
    K2, F = b.shape
    assert K == K2 and M % tile_m == 0 and F % tile_n == 0 and K % 128 == 0

    m_blocks = M // tile_m
    n_blocks = F // tile_n
    has_bias = bias is not None

    a_bytes = a.size * a.dtype.itemsize
    b_bytes = b.size * b.dtype.itemsize
    o_bytes = M * F * jnp.dtype(out_dtype).itemsize

    if K <= K_RESIDENT_MAX:
        # ---- resident-K path: grid (j, i); k collapsed, no accumulator. ----
        in_specs = [
            pl.BlockSpec((tile_m, K), lambda j, i: (i, 0)),   # A row slab
            pl.BlockSpec((K, tile_n), lambda j, i: (0, j)),   # B resident over i
        ]
        operands = [a, b]
        if has_bias:
            in_specs.append(pl.BlockSpec((1, tile_n), lambda j, i: (0, j)))
            operands.append(bias)
        kernel = _mm_res_bias_relu_kernel if has_bias else _mm_res_kernel
        grid = (n_blocks, m_blocks)
        out_spec = pl.BlockSpec((tile_m, tile_n), lambda j, i: (i, j))
        scratch = []
        dim_sem = ("parallel", "parallel")
        bytes_accessed = a_bytes * n_blocks + b_bytes + o_bytes
    else:
        # ---- tiled-K path: grid (i, j, k); f32 VMEM accumulator. ----
        assert K % TILE_K == 0
        k_blocks = K // TILE_K
        in_specs = [
            pl.BlockSpec((tile_m, TILE_K), lambda i, j, k: (i, k)),
            pl.BlockSpec((TILE_K, tile_n), lambda i, j, k: (k, j)),
        ]
        operands = [a, b]
        if has_bias:
            in_specs.append(pl.BlockSpec((1, tile_n), lambda i, j, k: (0, j)))
            operands.append(bias)
        kernel = _mm_acc_bias_relu_kernel if has_bias else _mm_acc_kernel
        grid = (m_blocks, n_blocks, k_blocks)
        out_spec = pl.BlockSpec((tile_m, tile_n), lambda i, j, k: (i, j))
        scratch = [pltpu.VMEM((tile_m, tile_n), jnp.float32)]
        dim_sem = ("parallel", "parallel", "arbitrary")
        # A is re-read once per j block, B once per i block.
        bytes_accessed = a_bytes * n_blocks + b_bytes * m_blocks + o_bytes

    return pl.pallas_call(
        kernel,
        out_shape=jax.ShapeDtypeStruct((M, F), out_dtype),
        grid_spec=pltpu.PrefetchScalarGridSpec(
            num_scalar_prefetch=0,
            grid=grid,
            in_specs=in_specs,
            out_specs=out_spec,
            scratch_shapes=scratch,
        ),
        compiler_params=pltpu.CompilerParams(
            dimension_semantics=dim_sem,
            vmem_limit_bytes=_vmem_limit_bytes(),
        ),
        cost_estimate=pl.CostEstimate(
            flops=2 * M * K * F,
            transcendentals=0,
            bytes_accessed=bytes_accessed,
        ),
    )(*operands)


# ---------------------------------------------------------------------------
# GCN layer forward:  relu(adj @ (x @ W) + b)
# ---------------------------------------------------------------------------
def graph_convolution(x, adj, weight, bias):
    """x: [N, in_f], adj: [N, N], weight: [in_f, out_f], bias: [out_f]."""
    n, in_f = x.shape
    out_f = weight.shape[1]
    out_dtype = x.dtype

    flip = out_f > in_f   # (adj @ x) @ W keeps the smaller intermediate resident

    # Row dimension: M for both matmuls and K for the adjacency matmul.
    tile_m = _pick_tile_m(n)
    n_as_k = _round_up(n, 128)
    n_align = tile_m if n_as_k <= K_RESIDENT_MAX else max(tile_m, TILE_K)
    n_p = _round_up(n, n_align)

    # Feature dims: pad lane dims to 128 only; 256-align only if K gets tiled.
    in_p = _round_up(in_f, 128)
    if in_p > K_RESIDENT_MAX:
        in_p = _round_up(in_f, TILE_K)
    out_p = _round_up(out_f, 128)

    # bf16 matmul operands (f32 accumulation in-kernel); bias stays f32.
    # TODO(synk): for tighter accuracy keep the stage-1 intermediate in f32
    # (costs 2x intermediate HBM bytes and an f32 stage-2 matmul input).
    xp = _pad_cast(x, n_p, in_p, jnp.bfloat16)
    adjp = _pad_cast(adj, n_p, n_p, jnp.bfloat16)
    wp = _pad_cast(weight, in_p, out_p, jnp.bfloat16)
    bp = _pad_cast(bias.reshape(1, out_f), 1, out_p, jnp.float32)

    if not flip:
        # adj @ (x @ W): resident intermediate is the smaller [N, out_p].
        tn = _pick_tile_n(out_p)
        support = _tiled_matmul(xp, wp, out_dtype=jnp.bfloat16,
                                tile_m=tile_m, tile_n=tn)
        out = _tiled_matmul(adjp, support, bp, out_dtype=out_dtype,
                            tile_m=tile_m, tile_n=tn)
    else:
        # (adj @ x) @ W: resident intermediate is the smaller [N, in_p].
        hidden = _tiled_matmul(adjp, xp, out_dtype=jnp.bfloat16,
                               tile_m=tile_m, tile_n=_pick_tile_n(in_p))
        out = _tiled_matmul(hidden, wp, bp, out_dtype=out_dtype,
                            tile_m=tile_m, tile_n=_pick_tile_n(out_p))

    return out[:n, :out_f]


def init_params(key, in_features, out_features):
    """Deterministic xavier_uniform weight + zero bias (matches reset_parameters)."""
    bound = math.sqrt(6.0 / (in_features + out_features))
    weight = jax.random.uniform(
        key, (in_features, out_features), dtype=jnp.float32,
        minval=-bound, maxval=bound)
    bias = jnp.zeros((out_features,), dtype=jnp.float32)
    return weight, bias


if __name__ == "__main__":
    # Small synthetic problem: N=8 nodes, in_features=32, out_features=32.
    N, IN_F, OUT_F = 8, 32, 32

    key = jax.random.PRNGKey(0)
    k_w, k_x, k_adj = jax.random.split(key, 3)

    weight, bias = init_params(k_w, IN_F, OUT_F)
    x = jax.random.normal(k_x, (N, IN_F), dtype=jnp.float32)

    # Symmetric, row-normalized adjacency with self-loops.
    a = (jax.random.uniform(k_adj, (N, N)) > 0.5).astype(jnp.float32)
    a = jnp.maximum(a, a.T) + jnp.eye(N, dtype=jnp.float32)
    adj = a / jnp.sum(a, axis=1, keepdims=True)

    out = graph_convolution(x, adj, weight, bias)
    out = jax.block_until_ready(out)

    # Reference check in plain JAX (f32); loose tol for bf16 matmul inputs.
    ref = jnp.maximum(adj @ (x @ weight) + bias, 0.0)
    assert out.shape == (N, OUT_F)
    assert jnp.allclose(out, ref, atol=5e-2, rtol=5e-2), (
        f"max abs err {jnp.max(jnp.abs(out - ref))}")

    print("KERNEL_OK")
</pallas_src>

<mosaic_0001>
module attributes {stable_mosaic.version = 11 : i64} {
  func.func @_mm_res_kernel(%arg0: i32, %arg1: i32, %arg2: memref<128x128xbf16, #tpu.memory_space<vmem>>, %arg3: memref<128x128xbf16, #tpu.memory_space<vmem>>, %arg4: memref<128x128xbf16, #tpu.memory_space<vmem>>) attributes {dimension_semantics = [#tpu.dimension_semantics<parallel>, #tpu.dimension_semantics<parallel>], iteration_bounds = array<i64: 1, 1>, scalar_prefetch = 0 : i64, scratch_operands = 0 : i64, tpu.core_type = #tpu.core_type<tc>, window_params = [{transform_indices = @transform_0, window_bounds = array<i64: 128, 128>}, {transform_indices = @transform_1, window_bounds = array<i64: 128, 128>}, {transform_indices = @transform_2, window_bounds = array<i64: 128, 128>}]} {
    %c0 = arith.constant 0 : index
    %c0_0 = arith.constant 0 : index
    %0 = vector.load %arg2[%c0, %c0_0] : memref<128x128xbf16, #tpu.memory_space<vmem>>, vector<128x128xbf16>
    %c0_1 = arith.constant 0 : index
    %c0_2 = arith.constant 0 : index
    %1 = vector.load %arg3[%c0_1, %c0_2] : memref<128x128xbf16, #tpu.memory_space<vmem>>, vector<128x128xbf16>
    %cst = arith.constant dense<0.000000e+00> : vector<128x128xf32>
    %2 = tpu.matmul %0, %1, %cst {dimension_numbers = #tpu.dot_dimension_numbers<[1], [0], [0], [1], [0, 0, 1, 1], [], []>} : vector<128x128xbf16>, vector<128x128xbf16>, vector<128x128xf32> -> vector<128x128xf32>
    %3 = arith.truncf %2 : vector<128x128xf32> to vector<128x128xbf16>
    %c0_3 = arith.constant 0 : index
    %c0_4 = arith.constant 0 : index
    %4 = vector.load %arg4[%c0_3, %c0_4] : memref<128x128xbf16, #tpu.memory_space<vmem>>, vector<128x128xbf16>
    tpu.vector_store %arg4[%c0_3, %c0_4], %3 {strides = array<i32>} : memref<128x128xbf16, #tpu.memory_space<vmem>>, vector<128x128xbf16>,
    return
  }
  func.func @transform_0(%arg0: i32, %arg1: i32) -> (i32, i32) {
    %c0_i32 = arith.constant 0 : i32
    %c0_i32_0 = arith.constant 0 : i32
    return %arg1, %c0_i32 : i32, i32
  }
  func.func @transform_1(%arg0: i32, %arg1: i32) -> (i32, i32) {
    %c0_i32 = arith.constant 0 : i32
    %c0_i32_0 = arith.constant 0 : i32
    return %c0_i32, %arg0 : i32, i32
  }
  func.func @transform_2(%arg0: i32, %arg1: i32) -> (i32, i32) {
    %c0_i32 = arith.constant 0 : i32
    return %arg1, %arg0 : i32, i32
  }
}

</mosaic_0001>

<llo_original>
// kernel: tpu_custom_call.1
$region0: #{tpu_custom_call.1}
  #allocation0 [shape = 'u32[]', space=smem, size = 0x4, offset = 0x4, fixed_abs, tag = 'smem constant byte address 0x4 - core index']
  #allocation1 [shape = 'u32[144,128]{1,0:T(1,128)}', space=vmem, size = 0x12000, scoped, tag = 'internal scratch']
  %s0 = inlined_call_operand.hbm [shape: bf16[128,128], index: 0, kind: input, shape index: {}]
  %s1 = inlined_call_operand.hbm [shape: bf16[128,128], index: 1, kind: input, shape index: {}]
  %s2 = inlined_call_operand.hbm [shape: bf16[128,128], index: 2, kind: output, shape index: {}]
  %s3 = sld [smem:[#allocation0]]
  $region26: #{tpu_custom_call.1} parent=0
    _
  %s5 = ssub.s32 1, %s3
  %s6 = scalar_select 0, %s5, %s3
  $region1: #{tpu_custom_call.1} parent=0
    #allocation2 [shape = 'u8[32768]{0}', space=vmem, size = 0x8000, scoped, tag = 'input window, operand 0, single buffered']
    #allocation3 [shape = 's32[1]{0}', space=sflag, size = 0x4, scoped, tag = 'scoped memory for tpu_custom_call.1']
    #allocation4 [shape = 's32[1]{0}', space=sflag, size = 0x4, scoped, tag = 'scoped memory for tpu_custom_call.1']
    #allocation5 [shape = 'u8[32768]{0}', space=vmem, size = 0x8000, scoped, tag = 'input window, operand 1, single buffered']
    #allocation6 [shape = 's32[1]{0}', space=sflag, size = 0x4, scoped, tag = 'scoped memory for tpu_custom_call.1']
    #allocation7 [shape = 'u8[32768]{0}', space=vmem, size = 0x8000, scoped, tag = 'output window, operand 0, single buffered']
    %7 = vsyncpa [#allocation3], 0
    %8 = vsyncpa [#allocation6], 0
    %9 = vsyncpa [#allocation4], 0
    // Predicated region
    $region2: #{tpu_custom_call.1} parent=1 // pred_check
      _
    $region3: #{tpu_custom_call.1} parent=1 // pred_check_branch
      %11 = sbr.rel (0) target = $region5
    $region4: #{tpu_custom_call.1} parent=1 // pred_region
      %s13 = ssub.s32 1024, 1024
      %14 = vsyncadd [#allocation3], %s13
      %s15 = sshll.u32 [#allocation2], 4
      %s16 = int_to_ptr.vmem [resolvable:$true] %s15
      %21 = dma.hbm_to_vmem [thread:$0]  %s0, 1024, %s16, [#allocation3], 64, 64, 4
    $region5: #{tpu_custom_call.1} parent=1 // pred_fallthru
      _
    // Predicated region
    $region6: #{tpu_custom_call.1} parent=1 // pred_check
      _
    $region7: #{tpu_custom_call.1} parent=1 // pred_check_branch
      %23 = sbr.rel (0) target = $region9
    $region8: #{tpu_custom_call.1} parent=1 // pred_region
      %s25 = ssub.s32 1024, 1024
      %26 = vsyncadd [#allocation6], %s25
      %s27 = sshll.u32 [#allocation5], 4
      %s28 = int_to_ptr.vmem [resolvable:$true] %s27
      %33 = dma.hbm_to_vmem [thread:$0]  %s1, 1024, %s28, [#allocation6], 64, 64, 4
    $region9: #{tpu_custom_call.1} parent=1 // pred_fallthru
      _
    // Predicated region
    $region10: #{tpu_custom_call.1} parent=1 // pred_check
      _
    $region11: #{tpu_custom_call.1} parent=1 // pred_check_branch
      %35 = sbr.rel (0) target = $region13
    $region12: #{tpu_custom_call.1} parent=1 // pred_region
      %36 = dma.done [#allocation3], 1024
    $region13: #{tpu_custom_call.1} parent=1 // pred_fallthru
      _
    // Predicated region
    $region14: #{tpu_custom_call.1} parent=1 // pred_check
      _
    $region15: #{tpu_custom_call.1} parent=1 // pred_check_branch
      %38 = sbr.rel (0) target = $region17
    $region16: #{tpu_custom_call.1} parent=1 // pred_region
      %39 = dma.done [#allocation6], 1024
    $region17: #{tpu_custom_call.1} parent=1 // pred_fallthru
      _
    %v41 = vld [vmem:[#allocation2] sm:$0xf]
    %v42 = vld [vmem:[#allocation2 + $0x4] sm:$0xf]
    %v43 = vld [vmem:[#allocation2 + $0x8] sm:$0xf]
    %v44 = vld [vmem:[#allocation2 + $0xc] sm:$0xf]
    %v45 = vld [vmem:[#allocation2 + $0x10] sm:$0xf]
    %v46 = vld [vmem:[#allocation2 + $0x14] sm:$0xf]
    %v47 = vld [vmem:[#allocation2 + $0x18] sm:$0xf]
    %v48 = vld [vmem:[#allocation2 + $0x1c] sm:$0xf]
    %v49 = vld [vmem:[#allocation2 + $0x20] sm:$0xf]
    %v50 = vld [vmem:[#allocation2 + $0x24] sm:$0xf]
    %v51 = vld [vmem:[#allocation2 + $0x28] sm:$0xf]
    %v52 = vld [vmem:[#allocation2 + $0x2c] sm:$0xf]
    %v53 = vld [vmem:[#allocation2 + $0x30] sm:$0xf]
    %v54 = vld [vmem:[#allocation2 + $0x34] sm:$0xf]
    %v55 = vld [vmem:[#allocation2 + $0x38] sm:$0xf]
    %v56 = vld [vmem:[#allocation2 + $0x3c] sm:$0xf]
    %v57 = vld [vmem:[#allocation5] sm:$0xf]
    %v58 = vld [vmem:[#allocation5 + $0x4] sm:$0xf]
    %v59 = vld [vmem:[#allocation5 + $0x8] sm:$0xf]
    %v60 = vld [vmem:[#allocation5 + $0xc] sm:$0xf]
    %v61 = vld [vmem:[#allocation5 + $0x10] sm:$0xf]
    %v62 = vld [vmem:[#allocation5 + $0x14] sm:$0xf]
    %v63 = vld [vmem:[#allocation5 + $0x18] sm:$0xf]
    %v64 = vld [vmem:[#allocation5 + $0x1c] sm:$0xf]
    %v65 = vld [vmem:[#allocation5 + $0x20] sm:$0xf]
    %v66 = vld [vmem:[#allocation5 + $0x24] sm:$0xf]
    %v67 = vld [vmem:[#allocation5 + $0x28] sm:$0xf]
    %v68 = vld [vmem:[#allocation5 + $0x2c] sm:$0xf]
    %v69 = vld [vmem:[#allocation5 + $0x30] sm:$0xf]
    %v70 = vld [vmem:[#allocation5 + $0x34] sm:$0xf]
    %v71 = vld [vmem:[#allocation5 + $0x38] sm:$0xf]
    %v72 = vld [vmem:[#allocation5 + $0x3c] sm:$0xf]
    %v89 = vunpack.c.l.b16 %v41
    %v90 = vunpack.c.l.b16 %v42
    %v91 = vunpack.c.l.b16 %v43
    %v92 = vunpack.c.l.b16 %v44
    %v93 = vunpack.c.l.b16 %v45
    %v94 = vunpack.c.l.b16 %v46
    %v95 = vunpack.c.l.b16 %v47
    %v96 = vunpack.c.l.b16 %v48
    %v97 = vunpack.c.l.b16 %v49
    %v98 = vunpack.c.l.b16 %v50
    %v99 = vunpack.c.l.b16 %v51
    %v100 = vunpack.c.l.b16 %v52
    %v101 = vunpack.c.l.b16 %v53
    %v102 = vunpack.c.l.b16 %v54
    %v103 = vunpack.c.l.b16 %v55
    %v104 = vunpack.c.l.b16 %v56
    %v105 = vpack.c.b16 %v90, %v89
    %v106 = vpack.c.b16 %v92, %v91
    %v107 = vpack.c.b16 %v94, %v93
    %v108 = vpack.c.b16 %v96, %v95
    %v109 = vpack.c.b16 %v98, %v97
    %v110 = vpack.c.b16 %v100, %v99
    %v111 = vpack.c.b16 %v102, %v101
    %v112 = vpack.c.b16 %v104, %v103
    %v137 = vunpack.c.l.b16 %v57
    %v138 = vunpack.c.l.b16 %v58
    %v139 = vunpack.c.l.b16 %v59
    %v140 = vunpack.c.l.b16 %v60
    %v141 = vunpack.c.l.b16 %v61
    %v142 = vunpack.c.l.b16 %v62
    %v143 = vunpack.c.l.b16 %v63
    %v144 = vunpack.c.l.b16 %v64
    %v145 = vunpack.c.l.b16 %v65
    %v146 = vunpack.c.l.b16 %v66
    %v147 = vunpack.c.l.b16 %v67
    %v148 = vunpack.c.l.b16 %v68
    %v149 = vunpack.c.l.b16 %v69
    %v150 = vunpack.c.l.b16 %v70
    %v151 = vunpack.c.l.b16 %v71
    %v152 = vunpack.c.l.b16 %v72
    %v153 = vpack.c.b16 %v138, %v137
    %v154 = vpack.c.b16 %v140, %v139
    %v155 = vpack.c.b16 %v142, %v141
    %v156 = vpack.c.b16 %v144, %v143
    %v157 = vpack.c.b16 %v146, %v145
    %v158 = vpack.c.b16 %v148, %v147
    %v159 = vpack.c.b16 %v150, %v149
    %v160 = vpack.c.b16 %v152, %v151
    %169 = vmatprep.subr.bf16.mxu0 0
    %170 = vmatpush1.bf16.msra.mxu0 %v153
    %171 = vmatprep.subr.bf16.mxu0 0
    %172 = vmatpush1.bf16.msra.mxu0 %v154
    %173 = vmatprep.subr.bf16.mxu0 0
    %174 = vmatpush1.bf16.msra.mxu0 %v155
    %175 = vmatprep.subr.bf16.mxu0 0
    %176 = vmatpush1.bf16.msra.mxu0 %v156
    %177 = vmatprep.subr.bf16.mxu0 0
    %178 = vmatpush1.bf16.msra.mxu0 %v157
    %179 = vmatprep.subr.bf16.mxu0 0
    %180 = vmatpush1.bf16.msra.mxu0 %v158
    %181 = vmatprep.subr.bf16.mxu0 0
    %182 = vmatpush1.bf16.msra.mxu0 %v159
    %183 = vmatprep.subr.bf16.mxu0 0
    %184 = vmatpush1.bf16.msra.mxu0 %v160
    %185 = vmatprep.subr.bf16.mxu0 0
    %186 = vmatpush1.bf16.msra.mxu0 0
    %187 = vmatprep.subr.bf16.mxu0 0
    %188 = vmatpush1.bf16.msra.mxu0 0
    %189 = vmatprep.subr.bf16.mxu0 0
    %190 = vmatpush1.bf16.msra.mxu0 0
    %191 = vmatprep.subr.bf16.mxu0 0
    %192 = vmatpush1.bf16.msra.mxu0 0
    %193 = vmatprep.subr.bf16.mxu0 0
    %194 = vmatpush1.bf16.msra.mxu0 0
    %195 = vmatprep.subr.bf16.mxu0 0
    %196 = vmatpush1.bf16.msra.mxu0 0
    %197 = vmatprep.subr.bf16.mxu0 0
    %198 = vmatpush1.bf16.msra.mxu0 0
    %199 = vmatprep.subr.bf16.mxu0 0
    %200 = vmatpush1.bf16.msra.mxu0 0
    %201 = vmatprep.mubr.bf16.mxu0 0
    %202 = vmatmul.mubr.bf16.gmra.mrb[0].mxu0 %v105
    %v203 = vpop.f32.mrb[0].mxu0
    %v204 = vadd.f32 0.0, %v203
    %v205 = vpop.f32.mrb[0].mxu0
    %v206 = vpop.f32.mrb[0].mxu0
    %v207 = vadd.f32 0.0, %v206
    %v208 = vpop.f32.mrb[0].mxu0
    %209 = vmatprep.mubr.bf16.mxu0 0
    %210 = vmatmul.mubr.bf16.gmra.mrb[0].mxu0 %v106
    %v211 = vpop.f32.mrb[0].mxu0
    %v212 = vadd.f32 0.0, %v211
    %v213 = vpop.f32.mrb[0].mxu0
    %v214 = vpop.f32.mrb[0].mxu0
    %v215 = vadd.f32 0.0, %v214
    %v216 = vpop.f32.mrb[0].mxu0
    %217 = vmatprep.mubr.bf16.mxu0 0
    %218 = vmatmul.mubr.bf16.gmra.mrb[0].mxu0 %v107
    %v219 = vpop.f32.mrb[0].mxu0
    %v220 = vadd.f32 0.0, %v219
    %v221 = vpop.f32.mrb[0].mxu0
    %v222 = vpop.f32.mrb[0].mxu0
    %v223 = vadd.f32 0.0, %v222
    %v224 = vpop.f32.mrb[0].mxu0
    %225 = vmatprep.mubr.bf16.mxu0 0
    %226 = vmatmul.mubr.bf16.gmra.mrb[0].mxu0 %v108
    %v227 = vpop.f32.mrb[0].mxu0
    %v228 = vadd.f32 0.0, %v227
    %v229 = vpop.f32.mrb[0].mxu0
    %v230 = vpop.f32.mrb[0].mxu0
    %v231 = vadd.f32 0.0, %v230
    %v232 = vpop.f32.mrb[0].mxu0
    %233 = vmatprep.mubr.bf16.mxu0 0
    %234 = vmatmul.mubr.bf16.gmra.mrb[0].mxu0 %v109
    %v235 = vpop.f32.mrb[0].mxu0
    %v236 = vadd.f32 0.0, %v235
    %v237 = vpop.f32.mrb[0].mxu0
    %v238 = vpop.f32.mrb[0].mxu0
    %v239 = vadd.f32 0.0, %v238
    %v240 = vpop.f32.mrb[0].mxu0
    %241 = vmatprep.mubr.bf16.mxu0 0
    %242 = vmatmul.mubr.bf16.gmra.mrb[0].mxu0 %v110
    %v243 = vpop.f32.mrb[0].mxu0
    %v244 = vadd.f32 0.0, %v243
    %v245 = vpop.f32.mrb[0].mxu0
    %v246 = vpop.f32.mrb[0].mxu0
    %v247 = vadd.f32 0.0, %v246
    %v248 = vpop.f32.mrb[0].mxu0
    %249 = vmatprep.mubr.bf16.mxu0 0
    %250 = vmatmul.mubr.bf16.gmra.mrb[0].mxu0 %v111
    %v251 = vpop.f32.mrb[0].mxu0
    %v252 = vadd.f32 0.0, %v251
    %v253 = vpop.f32.mrb[0].mxu0
    %v254 = vpop.f32.mrb[0].mxu0
    %v255 = vadd.f32 0.0, %v254
    %v256 = vpop.f32.mrb[0].mxu0
    %257 = vmatprep.mubr.bf16.mxu0 0
    %258 = vmatmul.mubr.bf16.gmra.mrb[0].mxu0 %v112
    %v259 = vpop.f32.mrb[0].mxu0
    %v260 = vadd.f32 0.0, %v259
    %v261 = vpop.f32.mrb[0].mxu0
    %v262 = vpop.f32.mrb[0].mxu0
    %v263 = vadd.f32 0.0, %v262
    %v264 = vpop.f32.mrb[0].mxu0
    %265 = vdwg.mxu0
    %v266 = vpack.c.bf16 %v207, %v204
    %v267 = vpack.c.bf16 %v215, %v212
    %v268 = vpack.c.bf16 %v223, %v220
    %v269 = vpack.c.bf16 %v231, %v228
    %v270 = vpack.c.bf16 %v239, %v236
    %v271 = vpack.c.bf16 %v247, %v244
    %v272 = vpack.c.bf16 %v255, %v252
    %v273 = vpack.c.bf16 %v263, %v260
    %v282 = vunpack.c.l.b16 %v266
    %v283 = vunpack.c.h.b16 %v266
    %v284 = vunpack.c.l.b16 %v267
    %v285 = vunpack.c.h.b16 %v267
    %v286 = vunpack.c.l.b16 %v268
    %v287 = vunpack.c.h.b16 %v268
    %v288 = vunpack.c.l.b16 %v269
    %v289 = vunpack.c.h.b16 %v269
    %v290 = vunpack.c.l.b16 %v270
    %v291 = vunpack.c.h.b16 %v270
    %v292 = vunpack.c.l.b16 %v271
    %v293 = vunpack.c.h.b16 %v271
    %v294 = vunpack.c.l.b16 %v272
    %v295 = vunpack.c.h.b16 %v272
    %v296 = vunpack.c.l.b16 %v273
    %v297 = vunpack.c.h.b16 %v273
    %v298 = vpack.c.b16 %v282, %v282
    %v299 = vpack.c.b16 %v283, %v283
    %v300 = vpack.c.b16 %v284, %v284
    %v301 = vpack.c.b16 %v285, %v285
    %v302 = vpack.c.b16 %v286, %v286
    %v303 = vpack.c.b16 %v287, %v287
    %v304 = vpack.c.b16 %v288, %v288
    %v305 = vpack.c.b16 %v289, %v289
    %v306 = vpack.c.b16 %v290, %v290
    %v307 = vpack.c.b16 %v291, %v291
    %v308 = vpack.c.b16 %v292, %v292
    %v309 = vpack.c.b16 %v293, %v293
    %v310 = vpack.c.b16 %v294, %v294
    %v311 = vpack.c.b16 %v295, %v295
    %v312 = vpack.c.b16 %v296, %v296
    %v313 = vpack.c.b16 %v297, %v297
    %330 = vst [vmem:[#allocation7] sm:$0xf] %v298
    %331 = vst [vmem:[#allocation7 + $0x4] sm:$0xf] %v299
    %332 = vst [vmem:[#allocation7 + $0x8] sm:$0xf] %v300
    %333 = vst [vmem:[#allocation7 + $0xc] sm:$0xf] %v301
    %334 = vst [vmem:[#allocation7 + $0x10] sm:$0xf] %v302
    %335 = vst [vmem:[#allocation7 + $0x14] sm:$0xf] %v303
    %336 = vst [vmem:[#allocation7 + $0x18] sm:$0xf] %v304
    %337 = vst [vmem:[#allocation7 + $0x1c] sm:$0xf] %v305
    %338 = vst [vmem:[#allocation7 + $0x20] sm:$0xf] %v306
    %339 = vst [vmem:[#allocation7 + $0x24] sm:$0xf] %v307
    %340 = vst [vmem:[#allocation7 + $0x28] sm:$0xf] %v308
    %341 = vst [vmem:[#allocation7 + $0x2c] sm:$0xf] %v309
    %342 = vst [vmem:[#allocation7 + $0x30] sm:$0xf] %v310
    %343 = vst [vmem:[#allocation7 + $0x34] sm:$0xf] %v311
    %344 = vst [vmem:[#allocation7 + $0x38] sm:$0xf] %v312
    %345 = vst [vmem:[#allocation7 + $0x3c] sm:$0xf] %v313
    // Predicated region
    $region18: #{tpu_custom_call.1} parent=1 // pred_check
      _
    $region19: #{tpu_custom_call.1} parent=1 // pred_check_branch
      %347 = sbr.rel (0) target = $region21
    $region20: #{tpu_custom_call.1} parent=1 // pred_region
      %s349 = ssub.s32 1024, 1024
      %350 = vsyncadd [#allocation4], %s349
      %s351 = sshll.u32 [#allocation7], 4
      %s352 = int_to_ptr.vmem [resolvable:$true] %s351
      %357 = dma.vmem_to_hbm [thread:$0]  %s352, 1024, %s2, [#allocation4], 64, 64, 4
    $region21: #{tpu_custom_call.1} parent=1 // pred_fallthru
      _
    // Predicated region
    $region22: #{tpu_custom_call.1} parent=1 // pred_check
      _
    $region23: #{tpu_custom_call.1} parent=1 // pred_check_branch
      %359 = sbr.rel (0) target = $region25
    $region24: #{tpu_custom_call.1} parent=1 // pred_region
      %360 = dma.done [#allocation4], 1024
    $region25: #{tpu_custom_call.1} parent=1 // pred_fallthru
      _
    %361 = vsyncpa [#allocation3], 1
    %362 = vsyncpa [#allocation6], 1
    %363 = vsyncpa [#allocation4], 1

</llo_original>
